<compile_context>
chip_gen: v5e
topology: v5e:2x2
jax: 0.10.0
libtpu: 0.0.40
codegen_flags: <defaults>
</compile_context>

<pallas_src>
import jax
import jax.numpy as jnp
from jax.experimental import pallas as pl
from jax.experimental.pallas import tpu as pltpu


def _round_up(x, m):
    return (x + m - 1) // m * m


def fused_norm_head_kernel(x_ref, mean_ref, inv_std_ref, w_ref, b_ref, o_ref,
                           acc_ref):
    """One (tm, tn) output tile; grid axis 2 walks the K (= C*H*W) reduction.

    The per-channel normalization ((x - mean) * inv_std) is applied as a
    prologue on each (tm, tk) LHS tile, so the normalized activations never
    leave VMEM.
    """
    k = pl.program_id(2)

    @pl.when(k == 0)
    def _():
        acc_ref[...] = jnp.zeros_like(acc_ref)

    x_norm = (x_ref[...] - mean_ref[...]) * inv_std_ref[...]
    acc_ref[...] += jnp.dot(x_norm, w_ref[...],
                            preferred_element_type=jnp.float32)

    @pl.when(k == pl.num_programs(2) - 1)
    def _():
        o_ref[...] = (acc_ref[...] + b_ref[...]).astype(o_ref.dtype)


def normalized_model_forward(x, mean, std, w, b, *, tm=128, tn=128, tk=512):
    """Fused normalize + stand-in classifier head.

    # TODO(synk): the real `self.model` (an externally injected ResNet18
    # student) is not defined in the source module; the stand-in is a
    # deterministic flatten + linear classifier head, with the normalization
    # fused into its LHS prologue (exactly equivalent to normalize-then-model).
    """
    N, C, H, W = x.shape
    K = C * H * W
    num_classes = w.shape[1]

    # Per-flattened-column normalization vectors: column k's channel is
    # k // (H*W) under NCHW flattening.  One reciprocal per channel on host.
    inv_std = 1.0 / std.astype(jnp.float32)
    mean_k = jnp.repeat(mean.astype(jnp.float32), H * W).reshape(1, K)
    inv_std_k = jnp.repeat(inv_std, H * W).reshape(1, K)

    # NCHW -> (N, K) is a contiguous (no-relayout) flatten; K is lane-dense.
    x_flat = x.reshape(N, K).astype(jnp.float32)

    # Pad to (8, 128)-aligned tiles; padded rows/cols are zero and sliced off.
    m_pad = _round_up(N, 8)
    nc_pad = _round_up(num_classes, 128)
    k_pad = _round_up(K, 128)

    tm = min(tm, m_pad)
    tn = min(tn, nc_pad)
    tk = min(tk, k_pad)

    m_pad = _round_up(m_pad, tm)
    nc_pad = _round_up(nc_pad, tn)
    k_pad = _round_up(k_pad, tk)

    x_p = jnp.zeros((m_pad, k_pad), jnp.float32).at[:N, :K].set(x_flat)
    mean_p = jnp.zeros((1, k_pad), jnp.float32).at[:, :K].set(mean_k)
    inv_std_p = jnp.zeros((1, k_pad), jnp.float32).at[:, :K].set(inv_std_k)
    w_p = jnp.zeros((k_pad, nc_pad), jnp.float32).at[:K, :num_classes].set(
        w.astype(jnp.float32))
    b_p = jnp.zeros((1, nc_pad), jnp.float32).at[:, :num_classes].set(
        b.astype(jnp.float32))

    grid = (m_pad // tm, nc_pad // tn, k_pad // tk)

    out = pl.pallas_call(
        fused_norm_head_kernel,
        out_shape=jax.ShapeDtypeStruct((m_pad, nc_pad), jnp.float32),
        grid_spec=pltpu.PrefetchScalarGridSpec(
            num_scalar_prefetch=0,
            grid=grid,
            in_specs=[
                pl.BlockSpec((tm, tk), lambda i, j, k: (i, k)),   # x (flattened)
                pl.BlockSpec((1, tk), lambda i, j, k: (0, k)),    # per-col mean
                pl.BlockSpec((1, tk), lambda i, j, k: (0, k)),    # per-col 1/std
                pl.BlockSpec((tk, tn), lambda i, j, k: (k, j)),   # w
                pl.BlockSpec((1, tn), lambda i, j, k: (0, j)),    # b
            ],
            out_specs=pl.BlockSpec((tm, tn), lambda i, j, k: (i, j)),
            scratch_shapes=[pltpu.VMEM((tm, tn), jnp.float32)],
        ),
        compiler_params=pltpu.CompilerParams(
            dimension_semantics=("parallel", "parallel", "arbitrary")),
    )(x_p, mean_p, inv_std_p, w_p, b_p)

    return out[:N, :num_classes]


if __name__ == "__main__":
    key = jax.random.PRNGKey(0)
    kx, kw, kb = jax.random.split(key, 3)

    N, C, H, W = 2, 3, 16, 16
    NUM_CLASSES = 10

    # Inputs in [0, 1] as implied by the docstring.
    x = jax.random.uniform(kx, (N, C, H, W), dtype=jnp.float32)

    # ImageNet-style per-channel normalization constants (C,)
    mean = jnp.asarray([0.485, 0.456, 0.406], dtype=jnp.float32)
    std = jnp.asarray([0.229, 0.224, 0.225], dtype=jnp.float32)

    # Deterministic stand-in "model" parameters.
    w = jax.random.normal(kw, (C * H * W, NUM_CLASSES), dtype=jnp.float32) * 0.02
    b = jax.random.normal(kb, (1, NUM_CLASSES), dtype=jnp.float32) * 0.01

    out = normalized_model_forward(x, mean, std, w, b)
    out = jax.block_until_ready(out)

    # Pure-JAX reference for the same semantics (normalize, flatten, linear).
    ref_norm = (x - mean.reshape(1, C, 1, 1)) / std.reshape(1, C, 1, 1)
    ref = ref_norm.reshape(N, C * H * W) @ w + b
    assert out.shape == (N, NUM_CLASSES)
    assert jnp.allclose(out, ref, atol=2e-4, rtol=2e-4)

    print("KERNEL_OK")
</pallas_src>

<mosaic_0001>
module attributes {stable_mosaic.version = 11 : i64} {
  func.func @fused_norm_head_kernel(%arg0: i32, %arg1: i32, %arg2: i32, %arg3: memref<8x512xf32, #tpu.memory_space<vmem>>, %arg4: memref<1x512xf32, #tpu.memory_space<vmem>>, %arg5: memref<1x512xf32, #tpu.memory_space<vmem>>, %arg6: memref<512x128xf32, #tpu.memory_space<vmem>>, %arg7: memref<1x128xf32, #tpu.memory_space<vmem>>, %arg8: memref<8x128xf32, #tpu.memory_space<vmem>>, %arg9: memref<8x128xf32, #tpu.memory_space<vmem>>) attributes {dimension_semantics = [#tpu.dimension_semantics<parallel>, #tpu.dimension_semantics<parallel>, #tpu.dimension_semantics<arbitrary>], iteration_bounds = array<i64: 1, 1, 2>, scalar_prefetch = 0 : i64, scratch_operands = 1 : i64, tpu.core_type = #tpu.core_type<tc>, window_params = [{transform_indices = @transform_0, window_bounds = array<i64: 8, 512>}, {transform_indices = @transform_1, window_bounds = array<i64: 1, 512>}, {transform_indices = @transform_2, window_bounds = array<i64: 1, 512>}, {transform_indices = @transform_3, window_bounds = array<i64: 512, 128>}, {transform_indices = @transform_4, window_bounds = array<i64: 1, 128>}, {transform_indices = @transform_5, window_bounds = array<i64: 8, 128>}]} {
    %c0_i32 = arith.constant 0 : i32
    %0 = arith.cmpi eq, %arg2, %c0_i32 : i32
    %1 = arith.extui %0 : i1 to i32
    %c0_i32_0 = arith.constant 0 : i32
    %2 = arith.cmpi ne, %1, %c0_i32_0 : i32
    scf.if %2 {
      %cst_13 = arith.constant 0.000000e+00 : f32
      %18 = vector.broadcast %cst_13 : f32 to vector<8x128xf32>
      %c0_14 = arith.constant 0 : index
      %c0_15 = arith.constant 0 : index
      %19 = vector.load %arg9[%c0_14, %c0_15] : memref<8x128xf32, #tpu.memory_space<vmem>>, vector<8x128xf32>
      tpu.vector_store %arg9[%c0_14, %c0_15], %18 {strides = array<i32>} : memref<8x128xf32, #tpu.memory_space<vmem>>, vector<8x128xf32>,
    } else {
    }
    %c0 = arith.constant 0 : index
    %c0_1 = arith.constant 0 : index
    %3 = vector.load %arg3[%c0, %c0_1] : memref<8x512xf32, #tpu.memory_space<vmem>>, vector<8x512xf32>
    %c0_2 = arith.constant 0 : index
    %c0_3 = arith.constant 0 : index
    %4 = vector.load %arg4[%c0_2, %c0_3] : memref<1x512xf32, #tpu.memory_space<vmem>>, vector<1x512xf32>
    %5 = vector.broadcast %4 : vector<1x512xf32> to vector<8x512xf32>
    %6 = arith.subf %3, %5 : vector<8x512xf32>
    %c0_4 = arith.constant 0 : index
    %c0_5 = arith.constant 0 : index
    %7 = vector.load %arg5[%c0_4, %c0_5] : memref<1x512xf32, #tpu.memory_space<vmem>>, vector<1x512xf32>
    %8 = vector.broadcast %7 : vector<1x512xf32> to vector<8x512xf32>
    %9 = arith.mulf %6, %8 : vector<8x512xf32>
    %c0_6 = arith.constant 0 : index
    %c0_7 = arith.constant 0 : index
    %10 = vector.load %arg9[%c0_6, %c0_7] : memref<8x128xf32, #tpu.memory_space<vmem>>, vector<8x128xf32>
    %c0_8 = arith.constant 0 : index
    %c0_9 = arith.constant 0 : index
    %11 = vector.load %arg6[%c0_8, %c0_9] : memref<512x128xf32, #tpu.memory_space<vmem>>, vector<512x128xf32>
    %cst = arith.constant dense<0.000000e+00> : vector<8x128xf32>
    %12 = tpu.matmul %9, %11, %cst {dimension_numbers = #tpu.dot_dimension_numbers<[1], [0], [0], [1], [0, 0, 1, 1], [], []>} : vector<8x512xf32>, vector<512x128xf32>, vector<8x128xf32> -> vector<8x128xf32>
    %13 = arith.addf %10, %12 : vector<8x128xf32>
    %c0_10 = arith.constant 0 : index
    %c0_11 = arith.constant 0 : index
    %14 = vector.load %arg9[%c0_10, %c0_11] : memref<8x128xf32, #tpu.memory_space<vmem>>, vector<8x128xf32>
    tpu.vector_store %arg9[%c0_10, %c0_11], %13 {strides = array<i32>} : memref<8x128xf32, #tpu.memory_space<vmem>>, vector<8x128xf32>,
    %c1_i32 = arith.constant 1 : i32
    %15 = arith.cmpi eq, %arg2, %c1_i32 : i32
    %16 = arith.extui %15 : i1 to i32
    %c0_i32_12 = arith.constant 0 : i32
    %17 = arith.cmpi ne, %16, %c0_i32_12 : i32
    scf.if %17 {
      %c0_13 = arith.constant 0 : index
      %c0_14 = arith.constant 0 : index
      %18 = vector.load %arg9[%c0_13, %c0_14] : memref<8x128xf32, #tpu.memory_space<vmem>>, vector<8x128xf32>
      %c0_15 = arith.constant 0 : index
      %c0_16 = arith.constant 0 : index
      %19 = vector.load %arg7[%c0_15, %c0_16] : memref<1x128xf32, #tpu.memory_space<vmem>>, vector<1x128xf32>
      %20 = vector.broadcast %19 : vector<1x128xf32> to vector<8x128xf32>
      %21 = arith.addf %18, %20 : vector<8x128xf32>
      %c0_17 = arith.constant 0 : index
      %c0_18 = arith.constant 0 : index
      %22 = vector.load %arg8[%c0_17, %c0_18] : memref<8x128xf32, #tpu.memory_space<vmem>>, vector<8x128xf32>
      tpu.vector_store %arg8[%c0_17, %c0_18], %21 {strides = array<i32>} : memref<8x128xf32, #tpu.memory_space<vmem>>, vector<8x128xf32>,
    } else {
    }
    return
  }
  func.func @transform_0(%arg0: i32, %arg1: i32, %arg2: i32) -> (i32, i32) {
    %c0_i32 = arith.constant 0 : i32
    return %arg0, %arg2 : i32, i32
  }
  func.func @transform_1(%arg0: i32, %arg1: i32, %arg2: i32) -> (i32, i32) {
    %c0_i32 = arith.constant 0 : i32
    %c0_i32_0 = arith.constant 0 : i32
    return %c0_i32, %arg2 : i32, i32
  }
  func.func @transform_2(%arg0: i32, %arg1: i32, %arg2: i32) -> (i32, i32) {
    %c0_i32 = arith.constant 0 : i32
    %c0_i32_0 = arith.constant 0 : i32
    return %c0_i32, %arg2 : i32, i32
  }
  func.func @transform_3(%arg0: i32, %arg1: i32, %arg2: i32) -> (i32, i32) {
    %c0_i32 = arith.constant 0 : i32
    return %arg2, %arg1 : i32, i32
  }
  func.func @transform_4(%arg0: i32, %arg1: i32, %arg2: i32) -> (i32, i32) {
    %c0_i32 = arith.constant 0 : i32
    %c0_i32_0 = arith.constant 0 : i32
    return %c0_i32, %arg1 : i32, i32
  }
  func.func @transform_5(%arg0: i32, %arg1: i32, %arg2: i32) -> (i32, i32) {
    %c0_i32 = arith.constant 0 : i32
    return %arg0, %arg1 : i32, i32
  }
}

</mosaic_0001>

<llo_original>
// kernel: tpu_custom_call.1
$region0: #{tpu_custom_call.1}
  #allocation0 [shape = 'u32[]', space=smem, size = 0x4, offset = 0x4, fixed_abs, tag = 'smem constant byte address 0x4 - core index']
  #allocation1 [shape = 'u32[72,128]{1,0:T(1,128)}', space=vmem, size = 0x9000, scoped, tag = 'internal scratch']
  #allocation2 [shape = 'f32[8,128]{1,0:T(8,128)}', space=vmem, size = 0x1000, scoped, tag = 'scratch operand']
  %s0 = inlined_call_operand.hbm [shape: f32[8,1024], index: 0, kind: input, shape index: {}]
  %s1 = inlined_call_operand.hbm [shape: f32[1,1024], index: 1, kind: input, shape index: {}]
  %s2 = inlined_call_operand.hbm [shape: f32[1,1024], index: 2, kind: input, shape index: {}]
  %s3 = inlined_call_operand.hbm [shape: f32[1024,128], index: 3, kind: input, shape index: {}]
  %s4 = inlined_call_operand.vmem [shape: f32[1,128], index: 4, kind: input, shape index: {}]
  %s5 = inlined_call_operand.hbm [shape: f32[8,128], index: 5, kind: output, shape index: {}]
  %s6 = sld [smem:[#allocation0]]
  $region77: #{tpu_custom_call.1} parent=0
    _
  %s8 = ssub.s32 1, %s6
  %s9 = scalar_select 0, %s8, %s6
  $region1: #{tpu_custom_call.1} parent=0
    #allocation3 [shape = 'u8[32768]{0}', space=vmem, size = 0x8000, scoped, tag = 'input window, operand 0']
    #allocation4 [shape = 's32[2]{0}', space=sflag, size = 0x8, scoped, tag = 'scoped memory for tpu_custom_call.1']
    #allocation5 [shape = 's32[2]{0}', space=sflag, size = 0x8, scoped, tag = 'scoped memory for tpu_custom_call.1']
    #allocation6 [shape = 'u8[4096]{0}', space=vmem, size = 0x1000, scoped, tag = 'input window, operand 1']
    #allocation7 [shape = 's32[2]{0}', space=sflag, size = 0x8, scoped, tag = 'scoped memory for tpu_custom_call.1']
    #allocation8 [shape = 'u8[4096]{0}', space=vmem, size = 0x1000, scoped, tag = 'input window, operand 2']
    #allocation9 [shape = 'u8[524288]{0}', space=vmem, size = 0x80000, scoped, tag = 'input window, operand 3']
    #allocation10 [shape = 's32[2]{0}', space=sflag, size = 0x8, scoped, tag = 'scoped memory for tpu_custom_call.1']
    #allocation11 [shape = 'u8[4096]{0}', space=vmem, size = 0x1000, scoped, tag = 'output window, operand 0, single buffered']
    %10 = vsyncpa [#allocation4], 0
    %s11 = scalar_lea.sflag [#allocation4], 1
    %12 = vsyncpa %s11, 0
    %13 = vsyncpa [#allocation7], 0
    %s14 = scalar_lea.sflag [#allocation7], 1
    %15 = vsyncpa %s14, 0
    %16 = vsyncpa [#allocation10], 0
    %s17 = scalar_lea.sflag [#allocation10], 1
    %18 = vsyncpa %s17, 0
    %19 = vsyncpa [#allocation5], 0
    loop: start=0, step=1, limit=4
    $region2: #{tpu_custom_call.1} parent=1 // loop_pre_header
      _
    $region3: #{tpu_custom_call.1} parent=1 // loop_header
      %s21 = sphi 0, %s25
      %p22 = scmp.ge.s32.totalorder %s21, 4
      %s28 = sphi 0, %s47
      %s29 = sphi 0, %s43
      %s30 = sphi 0, %s39
      %s31 = sphi 0, %s28
      %s32 = sphi 0, %s29
      %s33 = sphi 0, %s30
      %s34 = sphi 0, %s31
      %s35 = sphi 0, %s32
      %s36 = sphi 0, %s33
      %s52 = sphi 0, %s54
      %s55 = sphi 0, %s52
      %s56 = sphi 0, %s55
      %s72 = sphi 0, %s56
      %s78 = sphi 0, %s80
      %s81 = sphi 0, %s78
      %s82 = sphi 0, %s81
      %s98 = sphi 0, %s82
      %s104 = sphi 0, %s106
      %s107 = sphi 0, %s104
      %s108 = sphi 0, %s107
      %s124 = sphi 0, %s108
      %s132 = sphi 0, %s134
      %s135 = sphi 0, %s132
      %s136 = sphi 0, %s135
      %s152 = sphi 0, %s136
      %s158 = sphi 0, %s160
      %s161 = sphi 0, %s158
      %s162 = sphi 0, %s161
      %s178 = sphi 0, %s162
      %s186 = sphi 0, %s188
      %s189 = sphi 0, %s186
      %s190 = sphi 0, %s189
      %s206 = sphi 0, %s190
    $region4: #{tpu_custom_call.1} parent=1 // loop_header_branch
      %24 = sbr.rel (%p22) target = $region8
    $region5: #{tpu_custom_call.1} parent=1 // loop_body
      %s26 = ssub.s32 %s21, 1
      %s27 = ssub.s32 %s21, 2
      %s37 = sadd.s32 1, %s30
      %p38 = scmp.ge.s32.totalorder %s37, 2
      %s39 = scalar_select %p38, 0, %s37
      %s40 = sadd.s32 1, %s29
      %s41 = scalar_select %p38, %s40, %s29
      %p42 = scmp.ge.s32.totalorder %s41, 1
      %s43 = scalar_select %p42, 0, %s41
      %s44 = sadd.s32 1, %s28
      %s45 = scalar_select %p42, %s44, %s28
      %p46 = scmp.ge.s32.totalorder %s45, 1
      %s47 = scalar_select %p46, 0, %s45
      %s48 = ssub.s32 %s28, %s47
      %s49 = ssub.s32 %s30, %s39
      %s50 = sor.u32 %s48, %s49
      %p51 = scmp.eq.s32.totalorder %s50, 0
      %s53 = sadd.s32 %s52, 1
      %s54 = scalar_select %p51, %s52, %s53
      %p57 = pneg %p51
      %p58 = scmp.eq.s32.totalorder %s21, 1
      %p59 = por %p57, %p58
      %p60 = scmp.ne.s32.totalorder %s52, %s55
      %p61 = scmp.eq.s32.totalorder %s21, 0
      %p62 = por %p60, %p61
      %p63 = scmp.ne.s32.totalorder %s52, %s55
      %p64 = scmp.eq.s32.totalorder %s26, 1
      %p65 = por %p63, %p64
      %p66 = scmp.ne.s32.totalorder %s55, %s56
      %p67 = scmp.eq.s32.totalorder %s26, 0
      %p68 = por %p66, %p67
      %p69 = scmp.ne.s32.totalorder %s55, %s56
      %p70 = scmp.eq.s32.totalorder %s27, 1
      %p71 = por %p69, %p70
      %p73 = scmp.ne.s32.totalorder %s56, %s72
      %p74 = scmp.eq.s32.totalorder %s27, 0
      %p75 = por %p73, %p74
      %s76 = ssub.s32 %s30, %s39
      %p77 = scmp.eq.s32.totalorder %s76, 0
      %s79 = sadd.s32 %s78, 1
      %s80 = scalar_select %p77, %s78, %s79
      %p83 = pneg %p77
      %p84 = scmp.eq.s32.totalorder %s21, 1
      %p85 = por %p83, %p84
      %p86 = scmp.ne.s32.totalorder %s78, %s81
      %p87 = scmp.eq.s32.totalorder %s21, 0
      %p88 = por %p86, %p87
      %p89 = scmp.ne.s32.totalorder %s78, %s81
      %p90 = scmp.eq.s32.totalorder %s26, 1
      %p91 = por %p89, %p90
      %p92 = scmp.ne.s32.totalorder %s81, %s82
      %p93 = scmp.eq.s32.totalorder %s26, 0
      %p94 = por %p92, %p93
      %p95 = scmp.ne.s32.totalorder %s81, %s82
      %p96 = scmp.eq.s32.totalorder %s27, 1
      %p97 = por %p95, %p96
      %p99 = scmp.ne.s32.totalorder %s82, %s98
      %p100 = scmp.eq.s32.totalorder %s27, 0
      %p101 = por %p99, %p100
      %s102 = ssub.s32 %s30, %s39
      %p103 = scmp.eq.s32.totalorder %s102, 0
      %s105 = sadd.s32 %s104, 1
      %s106 = scalar_select %p103, %s104, %s105
      %p109 = pneg %p103
      %p110 = scmp.eq.s32.totalorder %s21, 1
      %p111 = por %p109, %p110
      %p112 = scmp.ne.s32.totalorder %s104, %s107
      %p113 = scmp.eq.s32.totalorder %s21, 0
      %p114 = por %p112, %p113
      %p115 = scmp.ne.s32.totalorder %s104, %s107
      %p116 = scmp.eq.s32.totalorder %s26, 1
      %p117 = por %p115, %p116
      %p118 = scmp.ne.s32.totalorder %s107, %s108
      %p119 = scmp.eq.s32.totalorder %s26, 0
      %p120 = por %p118, %p119
      %p121 = scmp.ne.s32.totalorder %s107, %s108
      %p122 = scmp.eq.s32.totalorder %s27, 1
      %p123 = por %p121, %p122
      %p125 = scmp.ne.s32.totalorder %s108, %s124
      %p126 = scmp.eq.s32.totalorder %s27, 0
      %p127 = por %p125, %p126
      %s128 = ssub.s32 %s30, %s39
      %s129 = ssub.s32 %s29, %s43
      %s130 = sor.u32 %s128, %s129
      %p131 = scmp.eq.s32.totalorder %s130, 0
      %s133 = sadd.s32 %s132, 1
      %s134 = scalar_select %p131, %s132, %s133
      %p137 = pneg %p131
      %p138 = scmp.eq.s32.totalorder %s21, 1
      %p139 = por %p137, %p138
      %p140 = scmp.ne.s32.totalorder %s132, %s135
      %p141 = scmp.eq.s32.totalorder %s21, 0
      %p142 = por %p140, %p141
      %p143 = scmp.ne.s32.totalorder %s132, %s135
      %p144 = scmp.eq.s32.totalorder %s26, 1
      %p145 = por %p143, %p144
      %p146 = scmp.ne.s32.totalorder %s135, %s136
      %p147 = scmp.eq.s32.totalorder %s26, 0
      %p148 = por %p146, %p147
      %p149 = scmp.ne.s32.totalorder %s135, %s136
      %p150 = scmp.eq.s32.totalorder %s27, 1
      %p151 = por %p149, %p150
      %p153 = scmp.ne.s32.totalorder %s136, %s152
      %p154 = scmp.eq.s32.totalorder %s27, 0
      %p155 = por %p153, %p154
      %s156 = ssub.s32 %s29, %s43
      %p157 = scmp.eq.s32.totalorder %s156, 0
      %s159 = sadd.s32 %s158, 1
      %s160 = scalar_select %p157, %s158, %s159
      %p163 = pneg %p157
      %p164 = scmp.eq.s32.totalorder %s21, 1
      %p165 = por %p163, %p164
      %p166 = scmp.ne.s32.totalorder %s158, %s161
      %p167 = scmp.eq.s32.totalorder %s21, 0
      %p168 = por %p166, %p167
      %p169 = scmp.ne.s32.totalorder %s158, %s161
      %p170 = scmp.eq.s32.totalorder %s26, 1
      %p171 = por %p169, %p170
      %p172 = scmp.ne.s32.totalorder %s161, %s162
      %p173 = scmp.eq.s32.totalorder %s26, 0
      %p174 = por %p172, %p173
      %p175 = scmp.ne.s32.totalorder %s161, %s162
      %p176 = scmp.eq.s32.totalorder %s27, 1
      %p177 = por %p175, %p176
      %p179 = scmp.ne.s32.totalorder %s162, %s178
      %p180 = scmp.eq.s32.totalorder %s27, 0
      %p181 = por %p179, %p180
      %s182 = ssub.s32 %s28, %s47
      %s183 = ssub.s32 %s29, %s43
      %s184 = sor.u32 %s182, %s183
      %p185 = scmp.eq.s32.totalorder %s184, 0
      %s187 = sadd.s32 %s186, 1
      %s188 = scalar_select %p185, %s186, %s187
      %p191 = pneg %p185
      %p192 = scmp.eq.s32.totalorder %s21, 1
      %p193 = por %p191, %p192
      %p194 = scmp.ne.s32.totalorder %s186, %s189
      %p195 = scmp.eq.s32.totalorder %s21, 0
      %p196 = por %p194, %p195
      %p197 = scmp.ne.s32.totalorder %s186, %s189
      %p198 = scmp.eq.s32.totalorder %s26, 1
      %p199 = por %p197, %p198
      %p200 = scmp.ne.s32.totalorder %s189, %s190
      %p201 = scmp.eq.s32.totalorder %s26, 0
      %p202 = por %p200, %p201
      %p203 = scmp.ne.s32.totalorder %s189, %s190
      %p204 = scmp.eq.s32.totalorder %s27, 1
      %p205 = por %p203, %p204
      %p207 = scmp.ne.s32.totalorder %s190, %s206
      %p208 = scmp.eq.s32.totalorder %s27, 0
      %p209 = por %p207, %p208
      %p210 = scmp.le.s32.totalorder 1, %s21
      %p211 = scmp.lt.s32.totalorder %s21, 3
      %p212 = pnand %p210, %p211
      %p213 = pneg %p212
      // Predicated region
      $region9: #{tpu_custom_call.1} parent=5 // pred_check
        _
      $region10: #{tpu_custom_call.1} parent=5 // pred_check_branch
        %215 = sbr.rel (%p212) target = $region12
      $region11: #{tpu_custom_call.1} parent=5 // pred_region
        %s216 = ssub.s32 %s21, 1
        // Predicated region
        $region13: #{tpu_custom_call.1} parent=11 // pred_check
          %p217 = pneg %p174
        $region14: #{tpu_custom_call.1} parent=11 // pred_check_branch
          %219 = sbr.rel (%p217) target = $region16
        $region15: #{tpu_custom_call.1} parent=11 // pred_region
          %p220 = scmp.lt.s32.totalorder %s32, 0
          %s221 = scalar_select %p220, %s32, 0
          %s222 = scalar_lea.vmem %s4, %s221
        $region16: #{tpu_custom_call.1} parent=11 // pred_fallthru
          _
      $region12: #{tpu_custom_call.1} parent=5 // pred_fallthru
        _
      %p223 = scmp.lt.s32.totalorder %s21, 2
      // Predicated region
      $region17: #{tpu_custom_call.1} parent=5 // pred_check
        %p224 = pneg %p223
      $region18: #{tpu_custom_call.1} parent=5 // pred_check_branch
        %226 = sbr.rel (%p224) target = $region20
      $region19: #{tpu_custom_call.1} parent=5 // pred_region
        // Predicated region
        $region21: #{tpu_custom_call.1} parent=19 // pred_check
          %p227 = pneg %p62
        $region22: #{tpu_custom_call.1} parent=19 // pred_check_branch
          %229 = sbr.rel (%p227) target = $region24
        $region23: #{tpu_custom_call.1} parent=19 // pred_region
          %s230 = sand.u32 %s52, 1
          %s231 = scalar_lea.sflag [#allocation4], %s230
          %s232 = sand.u32 %s52, 1
          %s233 = smul.addr %s232, 32
          %s234 = scalar_lea.vmem [#allocation3], %s233
          %s235 = smul.u32 4, %s30
          %237 = vsyncadd %s231, 0
          %s238 = smul.addr %s28, 8
          %s239 = sadd.s32 %s235, %s238
          %s240 = smul.addr %s239, 8
          %s241 = scalar_lea.hbm %s0, %s240
          %s243 = sshll.u32 %s241, 4
          %s244 = int_to_ptr.hbm [resolvable:$true] %s243
          %s245 = sshll.u32 %s234, 4
          %s246 = int_to_ptr.vmem [resolvable:$true] %s245
          %248 = dma.hbm_to_vmem [thread:$0]  %s244, 512, %s246, %s231
        $region24: #{tpu_custom_call.1} parent=19 // pred_fallthru
          _
        // Predicated region
        $region25: #{tpu_custom_call.1} parent=19 // pred_check
          %p249 = pneg %p88
        $region26: #{tpu_custom_call.1} parent=19 // pred_check_branch
          %251 = sbr.rel (%p249) target = $region28
        $region27: #{tpu_custom_call.1} parent=19 // pred_region
          %s252 = sand.u32 %s21, 1
          %s253 = scalar_lea.sflag [#allocation7], %s252
          %s254 = sand.u32 %s78, 1
          %s255 = smul.addr %s254, 4
          %s256 = scalar_lea.vmem [#allocation6], %s255
          %s257 = smul.u32 4, %s30
          %259 = vsyncadd %s253, 0
          %s260 = scalar_lea.hbm %s1, %s257
          %s262 = sshll.u32 %s260, 4
          %s263 = int_to_ptr.hbm [resolvable:$true] %s262
          %s264 = sshll.u32 %s256, 4
          %s265 = int_to_ptr.vmem [resolvable:$true] %s264
          %267 = dma.hbm_to_vmem [thread:$0]  %s263, 64, %s265, %s253
        $region28: #{tpu_custom_call.1} parent=19 // pred_fallthru
          _
        // Predicated region
        $region29: #{tpu_custom_call.1} parent=19 // pred_check
          %p268 = pneg %p114
        $region30: #{tpu_custom_call.1} parent=19 // pred_check_branch
          %270 = sbr.rel (%p268) target = $region32
        $region31: #{tpu_custom_call.1} parent=19 // pred_region
          %s271 = sand.u32 %s21, 1
          %s272 = scalar_lea.sflag [#allocation7], %s271
          %s273 = sand.u32 %s104, 1
          %s274 = smul.addr %s273, 4
          %s275 = scalar_lea.vmem [#allocation8], %s274
          %s276 = smul.u32 4, %s30
          %278 = vsyncadd %s272, 0
          %s279 = scalar_lea.hbm %s2, %s276
          %s281 = sshll.u32 %s279, 4
          %s282 = int_to_ptr.hbm [resolvable:$true] %s281
          %s283 = sshll.u32 %s275, 4
          %s284 = int_to_ptr.vmem [resolvable:$true] %s283
          %286 = dma.hbm_to_vmem [thread:$0]  %s282, 64, %s284, %s272
        $region32: #{tpu_custom_call.1} parent=19 // pred_fallthru
          _
        // Predicated region
        $region33: #{tpu_custom_call.1} parent=19 // pred_check
          %p287 = pneg %p142
        $region34: #{tpu_custom_call.1} parent=19 // pred_check_branch
          %289 = sbr.rel (%p287) target = $region36
        $region35: #{tpu_custom_call.1} parent=19 // pred_region
          %s290 = sand.u32 %s132, 1
          %s291 = scalar_lea.sflag [#allocation10], %s290
          %s292 = sand.u32 %s132, 1
          %s293 = smul.addr %s292, 512
          %s294 = scalar_lea.vmem [#allocation9], %s293
          %s295 = smul.u32 64, %s30
          %297 = vsyncadd %s291, 0
          %s298 = sadd.s32 %s29, %s295
          %s299 = smul.addr %s298, 8
          %s300 = scalar_lea.hbm %s3, %s299
          %s301 = sshll.u32 %s300, 4
          %s302 = int_to_ptr.hbm [resolvable:$true] %s301
          %s303 = sshll.u32 %s294, 4
          %s304 = int_to_ptr.vmem [resolvable:$true] %s303
          %309 = dma.hbm_to_vmem [thread:$0]  %s302, 8192, %s304, %s291, 128, 128, 8
        $region36: #{tpu_custom_call.1} parent=19 // pred_fallthru
          _
      $region20: #{tpu_custom_call.1} parent=5 // pred_fallthru
        _
      %p310 = scmp.le.s32.totalorder 1, %s21
      %p311 = scmp.lt.s32.totalorder %s21, 3
      %p312 = pnand %p310, %p311
      %p313 = pneg %p312
      // Predicated region
      $region37: #{tpu_custom_call.1} parent=5 // pred_check
        _
      $region38: #{tpu_custom_call.1} parent=5 // pred_check_branch
        %315 = sbr.rel (%p312) target = $region40
      $region39: #{tpu_custom_call.1} parent=5 // pred_region
        %s316 = ssub.s32 %s21, 1
        %s317 = sand.u32 %s55, 1
        %s318 = scalar_lea.sflag [#allocation4], %s317
        %s319 = sand.u32 %s55, 1
        %s320 = smul.addr %s319, 32
        %s321 = scalar_lea.vmem [#allocation3], %s320
        // Predicated region
        $region41: #{tpu_custom_call.1} parent=39 // pred_check
          %p322 = pneg %p68
        $region42: #{tpu_custom_call.1} parent=39 // pred_check_branch
          %324 = sbr.rel (%p322) target = $region44
        $region43: #{tpu_custom_call.1} parent=39 // pred_region
          %326 = dma.done %s318, 512
        $region44: #{tpu_custom_call.1} parent=39 // pred_fallthru
          _
        %s327 = sand.u32 %s26, 1
        %s328 = scalar_lea.sflag [#allocation7], %s327
        %s329 = sand.u32 %s81, 1
        %s330 = smul.addr %s329, 4
        %s331 = scalar_lea.vmem [#allocation6], %s330
        // Predicated region
        $region45: #{tpu_custom_call.1} parent=39 // pred_check
          %p332 = pneg %p94
        $region46: #{tpu_custom_call.1} parent=39 // pred_check_branch
          %334 = sbr.rel (%p332) target = $region48
        $region47: #{tpu_custom_call.1} parent=39 // pred_region
          %336 = dma.done %s328, 64
        $region48: #{tpu_custom_call.1} parent=39 // pred_fallthru
          _
        %s337 = sand.u32 %s26, 1
        %s338 = scalar_lea.sflag [#allocation7], %s337
        %s339 = sand.u32 %s107, 1
        %s340 = smul.addr %s339, 4
        %s341 = scalar_lea.vmem [#allocation8], %s340
        // Predicated region
        $region49: #{tpu_custom_call.1} parent=39 // pred_check
          %p342 = pneg %p120
        $region50: #{tpu_custom_call.1} parent=39 // pred_check_branch
          %344 = sbr.rel (%p342) target = $region52
        $region51: #{tpu_custom_call.1} parent=39 // pred_region
          %346 = dma.done %s338, 64
        $region52: #{tpu_custom_call.1} parent=39 // pred_fallthru
          _
        %s347 = sand.u32 %s135, 1
        %s348 = scalar_lea.sflag [#allocation10], %s347
        %s349 = sand.u32 %s135, 1
        %s350 = smul.addr %s349, 512
        %s351 = scalar_lea.vmem [#allocation9], %s350
        // Predicated region
        $region53: #{tpu_custom_call.1} parent=39 // pred_check
          %p352 = pneg %p148
        $region54: #{tpu_custom_call.1} parent=39 // pred_check_branch
          %354 = sbr.rel (%p352) target = $region56
        $region55: #{tpu_custom_call.1} parent=39 // pred_region
          %356 = dma.done %s348, 8192
        $region56: #{tpu_custom_call.1} parent=39 // pred_fallthru
          _
        %s357 = sand.u32 %s55, 1
        %s358 = scalar_lea.sflag [#allocation4], %s357
        %s359 = sand.u32 %s55, 1
        %s360 = smul.addr %s359, 32
        %s361 = scalar_lea.vmem [#allocation3], %s360
        %p362 = pneg %p68
        %p363 = pneg %p65
        %s364 = sand.u32 %s26, 1
        %s365 = scalar_lea.sflag [#allocation7], %s364
        %s366 = sand.u32 %s81, 1
        %s367 = smul.addr %s366, 4
        %s368 = scalar_lea.vmem [#allocation6], %s367
        %p369 = pneg %p94
        %p370 = pneg %p91
        %s371 = sand.u32 %s26, 1
        %s372 = scalar_lea.sflag [#allocation7], %s371
        %s373 = sand.u32 %s107, 1
        %s374 = smul.addr %s373, 4
        %s375 = scalar_lea.vmem [#allocation8], %s374
        %p376 = pneg %p120
        %p377 = pneg %p117
        %s378 = sand.u32 %s135, 1
        %s379 = scalar_lea.sflag [#allocation10], %s378
        %s380 = sand.u32 %s135, 1
        %s381 = smul.addr %s380, 512
        %s382 = scalar_lea.vmem [#allocation9], %s381
        %p383 = pneg %p148
        %p384 = pneg %p145
        %p385 = scmp.lt.s32.totalorder %s32, 0
        %s386 = scalar_select %p385, %s32, 0
        %s387 = scalar_lea.vmem %s4, %s386
        %p388 = pneg %p174
        %p389 = pneg %p171
        %p390 = pneg %p202
        %p391 = pneg %p199
        %s392 = smul.u32 4, %s33
        %s393 = smul.u32 4, %s33
        %s394 = smul.u32 4, %s33
        %s395 = smul.u32 64, %s33
        %p396 = scmp.lt.s32.totalorder %s32, 0
        %s397 = scalar_select %p396, %s32, 0
        %s398 = scalar_lea.vmem %s4, %s397
        %p399 = scmp.eq.s32.totalorder %s33, 0
        // Predicated region
        $region57: #{tpu_custom_call.1} parent=39 // pred_check
          %p400 = pneg %p399
        $region58: #{tpu_custom_call.1} parent=39 // pred_check_branch
          %402 = sbr.rel (%p400) target = $region60
        $region59: #{tpu_custom_call.1} parent=39 // pred_region
          %403 = vst [vmem:[#allocation2] sm:$0xff] 0.0
        $region60: #{tpu_custom_call.1} parent=39 // pred_fallthru
          _
        %v404 = vld [vmem:[%s321] sm:$0xff]
        %v405 = vld [vmem:[%s321 + $0x8] sm:$0xff]
        %v406 = vld [vmem:[%s321 + $0x10] sm:$0xff]
        %v407 = vld [vmem:[%s321 + $0x18] sm:$0xff]
        %v408 = vld [vmem:[%s331] sm:$0xf]
        %v410 = vperm.slane %v408, 0
        %v411 = vperm.slane %v408, 1
        %v412 = vperm.slane %v408, 2
        %v413 = vperm.slane %v408, 3
        %v418 = vsub.f32 %v404, %v410
        %v419 = vsub.f32 %v405, %v411
        %v420 = vsub.f32 %v406, %v412
        %v421 = vsub.f32 %v407, %v413
        %v422 = vld [vmem:[%s341] sm:$0xf]
        %v424 = vperm.slane %v422, 0
        %v425 = vperm.slane %v422, 1
        %v426 = vperm.slane %v422, 2
        %v427 = vperm.slane %v422, 3
        %v432 = vmul.f32 %v418, %v424
        %v433 = vmul.f32 %v419, %v425
        %v434 = vmul.f32 %v420, %v426
        %v435 = vmul.f32 %v421, %v427
        %v436 = vld [vmem:[#allocation2] sm:$0xff]
        %v437 = vld [vmem:[%s351] sm:$0xff]
        %v438 = vld [vmem:[%s351 + $0x8] sm:$0xff]
        %v439 = vld [vmem:[%s351 + $0x10] sm:$0xff]
        %v440 = vld [vmem:[%s351 + $0x18] sm:$0xff]
        %v441 = vld [vmem:[%s351 + $0x20] sm:$0xff]
        %v442 = vld [vmem:[%s351 + $0x28] sm:$0xff]
        %v443 = vld [vmem:[%s351 + $0x30] sm:$0xff]
        %v444 = vld [vmem:[%s351 + $0x38] sm:$0xff]
        %v445 = vld [vmem:[%s351 + $0x40] sm:$0xff]
        %v446 = vld [vmem:[%s351 + $0x48] sm:$0xff]
        %v447 = vld [vmem:[%s351 + $0x50] sm:$0xff]
        %v448 = vld [vmem:[%s351 + $0x58] sm:$0xff]
        %v449 = vld [vmem:[%s351 + $0x60] sm:$0xff]
        %v450 = vld [vmem:[%s351 + $0x68] sm:$0xff]
        %v451 = vld [vmem:[%s351 + $0x70] sm:$0xff]
        %v452 = vld [vmem:[%s351 + $0x78] sm:$0xff]
        %v453 = vld [vmem:[%s351 + $0x80] sm:$0xff]
        %v454 = vld [vmem:[%s351 + $0x88] sm:$0xff]
        %v455 = vld [vmem:[%s351 + $0x90] sm:$0xff]
        %v456 = vld [vmem:[%s351 + $0x98] sm:$0xff]
        %v457 = vld [vmem:[%s351 + $0xa0] sm:$0xff]
        %v458 = vld [vmem:[%s351 + $0xa8] sm:$0xff]
        %v459 = vld [vmem:[%s351 + $0xb0] sm:$0xff]
        %v460 = vld [vmem:[%s351 + $0xb8] sm:$0xff]
        %v461 = vld [vmem:[%s351 + $0xc0] sm:$0xff]
        %v462 = vld [vmem:[%s351 + $0xc8] sm:$0xff]
        %v463 = vld [vmem:[%s351 + $0xd0] sm:$0xff]
        %v464 = vld [vmem:[%s351 + $0xd8] sm:$0xff]
        %v465 = vld [vmem:[%s351 + $0xe0] sm:$0xff]
        %v466 = vld [vmem:[%s351 + $0xe8] sm:$0xff]
        %v467 = vld [vmem:[%s351 + $0xf0] sm:$0xff]
        %v468 = vld [vmem:[%s351 + $0xf8] sm:$0xff]
        %v469 = vld [vmem:[%s351 + $0x100] sm:$0xff]
        %v470 = vld [vmem:[%s351 + $0x108] sm:$0xff]
        %v471 = vld [vmem:[%s351 + $0x110] sm:$0xff]
        %v472 = vld [vmem:[%s351 + $0x118] sm:$0xff]
        %v473 = vld [vmem:[%s351 + $0x120] sm:$0xff]
        %v474 = vld [vmem:[%s351 + $0x128] sm:$0xff]
        %v475 = vld [vmem:[%s351 + $0x130] sm:$0xff]
        %v476 = vld [vmem:[%s351 + $0x138] sm:$0xff]
        %v477 = vld [vmem:[%s351 + $0x140] sm:$0xff]
        %v478 = vld [vmem:[%s351 + $0x148] sm:$0xff]
        %v479 = vld [vmem:[%s351 + $0x150] sm:$0xff]
        %v480 = vld [vmem:[%s351 + $0x158] sm:$0xff]
        %v481 = vld [vmem:[%s351 + $0x160] sm:$0xff]
        %v482 = vld [vmem:[%s351 + $0x168] sm:$0xff]
        %v483 = vld [vmem:[%s351 + $0x170] sm:$0xff]
        %v484 = vld [vmem:[%s351 + $0x178] sm:$0xff]
        %v485 = vld [vmem:[%s351 + $0x180] sm:$0xff]
        %v486 = vld [vmem:[%s351 + $0x188] sm:$0xff]
        %v487 = vld [vmem:[%s351 + $0x190] sm:$0xff]
        %v488 = vld [vmem:[%s351 + $0x198] sm:$0xff]
        %v489 = vld [vmem:[%s351 + $0x1a0] sm:$0xff]
        %v490 = vld [vmem:[%s351 + $0x1a8] sm:$0xff]
        %v491 = vld [vmem:[%s351 + $0x1b0] sm:$0xff]
        %v492 = vld [vmem:[%s351 + $0x1b8] sm:$0xff]
        %v493 = vld [vmem:[%s351 + $0x1c0] sm:$0xff]
        %v494 = vld [vmem:[%s351 + $0x1c8] sm:$0xff]
        %v495 = vld [vmem:[%s351 + $0x1d0] sm:$0xff]
        %v496 = vld [vmem:[%s351 + $0x1d8] sm:$0xff]
        %v497 = vld [vmem:[%s351 + $0x1e0] sm:$0xff]
        %v498 = vld [vmem:[%s351 + $0x1e8] sm:$0xff]
        %v499 = vld [vmem:[%s351 + $0x1f0] sm:$0xff]
        %v500 = vld [vmem:[%s351 + $0x1f8] sm:$0xff]
        %501 = vmatpush.msra.mxu0 %v452
        %502 = vmatpush.msra.mxu0 %v451
        %503 = vmatpush.msra.mxu0 %v450
        %504 = vmatpush.msra.mxu0 %v449
        %505 = vmatpush.msra.mxu0 %v448
        %506 = vmatpush.msra.mxu0 %v447
        %507 = vmatpush.msra.mxu0 %v446
        %508 = vmatpush.msra.mxu0 %v445
        %509 = vmatpush.msra.mxu0 %v444
        %510 = vmatpush.msra.mxu0 %v443
        %511 = vmatpush.msra.mxu0 %v442
        %512 = vmatpush.msra.mxu0 %v441
        %513 = vmatpush.msra.mxu0 %v440
        %514 = vmatpush.msra.mxu0 %v439
        %515 = vmatpush.msra.mxu0 %v438
        %516 = vmatpush.msra.mxu0 %v437
        %517 = vmatmul.f32.gmra.mxu0 %v432
        %v518 = vpop.f32.mrf.mxu0
        %v519 = vadd.f32 0.0, %v518
        %520 = vdwg.mxu0
        %521 = vmatpush.msra.mxu0 %v468
        %522 = vmatpush.msra.mxu0 %v467
        %523 = vmatpush.msra.mxu0 %v466
        %524 = vmatpush.msra.mxu0 %v465
        %525 = vmatpush.msra.mxu0 %v464
        %526 = vmatpush.msra.mxu0 %v463
        %527 = vmatpush.msra.mxu0 %v462
        %528 = vmatpush.msra.mxu0 %v461
        %529 = vmatpush.msra.mxu0 %v460
        %530 = vmatpush.msra.mxu0 %v459
        %531 = vmatpush.msra.mxu0 %v458
        %532 = vmatpush.msra.mxu0 %v457
        %533 = vmatpush.msra.mxu0 %v456
        %534 = vmatpush.msra.mxu0 %v455
        %535 = vmatpush.msra.mxu0 %v454
        %536 = vmatpush.msra.mxu0 %v453
        %537 = vmatmul.f32.gmra.mxu0 %v433
        %v538 = vpop.f32.mrf.mxu0
        %v539 = vadd.f32 %v519, %v538
        %540 = vdwg.mxu0
        %541 = vmatpush.msra.mxu0 %v484
        %542 = vmatpush.msra.mxu0 %v483
        %543 = vmatpush.msra.mxu0 %v482
        %544 = vmatpush.msra.mxu0 %v481
        %545 = vmatpush.msra.mxu0 %v480
        %546 = vmatpush.msra.mxu0 %v479
        %547 = vmatpush.msra.mxu0 %v478
        %548 = vmatpush.msra.mxu0 %v477
        %549 = vmatpush.msra.mxu0 %v476
        %550 = vmatpush.msra.mxu0 %v475
        %551 = vmatpush.msra.mxu0 %v474
        %552 = vmatpush.msra.mxu0 %v473
        %553 = vmatpush.msra.mxu0 %v472
        %554 = vmatpush.msra.mxu0 %v471
        %555 = vmatpush.msra.mxu0 %v470
        %556 = vmatpush.msra.mxu0 %v469
        %557 = vmatmul.f32.gmra.mxu0 %v434
        %v558 = vpop.f32.mrf.mxu0
        %v559 = vadd.f32 %v539, %v558
        %560 = vdwg.mxu0
        %561 = vmatpush.msra.mxu0 %v500
        %562 = vmatpush.msra.mxu0 %v499
        %563 = vmatpush.msra.mxu0 %v498
        %564 = vmatpush.msra.mxu0 %v497
        %565 = vmatpush.msra.mxu0 %v496
        %566 = vmatpush.msra.mxu0 %v495
        %567 = vmatpush.msra.mxu0 %v494
        %568 = vmatpush.msra.mxu0 %v493
        %569 = vmatpush.msra.mxu0 %v492
        %570 = vmatpush.msra.mxu0 %v491
        %571 = vmatpush.msra.mxu0 %v490
        %572 = vmatpush.msra.mxu0 %v489
        %573 = vmatpush.msra.mxu0 %v488
        %574 = vmatpush.msra.mxu0 %v487
        %575 = vmatpush.msra.mxu0 %v486
        %576 = vmatpush.msra.mxu0 %v485
        %577 = vmatmul.f32.gmra.mxu0 %v435
        %v578 = vpop.f32.mrf.mxu0
        %v579 = vadd.f32 %v559, %v578
        %580 = vdwg.mxu0
        %v581 = vadd.f32 %v436, %v579
        %582 = vst [vmem:[#allocation2] sm:$0xff] %v581
        %p583 = scmp.eq.s32.totalorder %s33, 1
        // Predicated region
        $region61: #{tpu_custom_call.1} parent=39 // pred_check
          %p584 = pneg %p583
        $region62: #{tpu_custom_call.1} parent=39 // pred_check_branch
          %586 = sbr.rel (%p584) target = $region64
        $region63: #{tpu_custom_call.1} parent=39 // pred_region
          %v587 = vld [vmem:[#allocation2] sm:$0xff]
          %v588 = vld [vmem:[%s398] sm:$0x1]
          %v590 = vperm.slane %v588, 0
          %v592 = vadd.f32 %v587, %v590
          %593 = vst [vmem:[#allocation11] sm:$0xff] %v592
        $region64: #{tpu_custom_call.1} parent=39 // pred_fallthru
          _
        // Predicated region
        $region65: #{tpu_custom_call.1} parent=39 // pred_check
          %p594 = pneg %p199
        $region66: #{tpu_custom_call.1} parent=39 // pred_check_branch
          %596 = sbr.rel (%p594) target = $region68
        $region67: #{tpu_custom_call.1} parent=39 // pred_region
          %598 = vsyncadd [#allocation5], 0
          %s599 = sadd.s32 %s32, %s31
          %s600 = smul.addr %s599, 8
          %s601 = scalar_lea.hbm %s5, %s600
          %s603 = sshll.u32 [#allocation11], 4
          %s604 = int_to_ptr.vmem [resolvable:$true] %s603
          %s605 = sshll.u32 %s601, 4
          %s606 = int_to_ptr.hbm [resolvable:$true] %s605
          %608 = dma.vmem_to_hbm [thread:$0]  %s604, 128, %s606, [#allocation5]
        $region68: #{tpu_custom_call.1} parent=39 // pred_fallthru
          _
        // Predicated region
        $region69: #{tpu_custom_call.1} parent=39 // pred_check
          %p609 = pneg %p199
        $region70: #{tpu_custom_call.1} parent=39 // pred_check_branch
          %611 = sbr.rel (%p609) target = $region72
        $region71: #{tpu_custom_call.1} parent=39 // pred_region
          %613 = dma.done [#allocation5], 128
        $region72: #{tpu_custom_call.1} parent=39 // pred_fallthru
          _
      $region40: #{tpu_custom_call.1} parent=5 // pred_fallthru
        _
      %p614 = scmp.le.s32.totalorder 2, %s21
      // Predicated region
      $region73: #{tpu_custom_call.1} parent=5 // pred_check
        %p615 = pneg %p614
      $region74: #{tpu_custom_call.1} parent=5 // pred_check_branch
        %617 = sbr.rel (%p615) target = $region76
      $region75: #{tpu_custom_call.1} parent=5 // pred_region
        %s618 = ssub.s32 %s21, 2
      $region76: #{tpu_custom_call.1} parent=5 // pred_fallthru
        _
    $region6: #{tpu_custom_call.1} parent=1 // loop_footer
      %s25 = sadd.s32 1, %s21
    $region7: #{tpu_custom_call.1} parent=1 // loop_footer_branch
      %20 = sbr.rel target = $region3
    $region8: #{tpu_custom_call.1} parent=1 // loop_exit
      _
    %619 = vsyncpa [#allocation4], 1
    %s620 = scalar_lea.sflag [#allocation4], 1
    %621 = vsyncpa %s620, 1
    %622 = vsyncpa [#allocation7], 1
    %s623 = scalar_lea.sflag [#allocation7], 1
    %624 = vsyncpa %s623, 1
    %625 = vsyncpa [#allocation10], 1
    %s626 = scalar_lea.sflag [#allocation10], 1
    %627 = vsyncpa %s626, 1
    %628 = vsyncpa [#allocation5], 1
    %s629 = scalar_lea.sflag [#allocation5], 1
    %630 = vsyncpa %s629, 1

</llo_original>
